<compile_context>
chip_gen: v5e
topology: v5e:2x2
jax: 0.10.0
libtpu: 0.0.40
codegen_flags: <defaults>
</compile_context>

<pallas_src>
import jax
import jax.numpy as jnp
from jax.experimental import pallas as pl
from jax.experimental.pallas import tpu as pltpu

IN_DIM = 1434
DIMS = [IN_DIM, 128, 64, 32, 16, 2]
OUT_DIM = DIMS[-1]

SUBLANE = 8
OUT_PAD = 128                  # lane-dense output slab; real columns are [:, :2]
MAX_TILE_B = 1024              # ~15 MiB total VMEM (x dbl-buf + W + out) -> safe on all gens
VMEM_LIMIT_BYTES = 32 << 20    # explicit scoped-VMEM limit (covers v5e 16 MiB default)


def _round_up(a: int, m: int) -> int:
    return ((a + m - 1) // m) * m


def affine_kernel(x_ref, w_ref, b_ref, o_ref):
    # One MXU pass per batch tile: (tile_b, 1434) @ (1434, 128) + bias.
    acc = jnp.dot(x_ref[...], w_ref[...], preferred_element_type=jnp.float32)
    o_ref[...] = (acc + b_ref[...]).astype(o_ref.dtype)


def init_params(key):
    """Mirror nn.Linear init shapes: W (out,in), b (out,).
    Stored transposed as (in, out) and (1, out) so each layer is y = x @ W + b."""
    params = []
    for i in range(5):
        fan_in, fan_out = DIMS[i], DIMS[i + 1]
        key, kw, kb = jax.random.split(key, 3)
        bound = 1.0 / (fan_in ** 0.5)
        w = jax.random.uniform(kw, (fan_out, fan_in), jnp.float32, -bound, bound)
        b = jax.random.uniform(kb, (fan_out,), jnp.float32, -bound, bound)
        params.append((w.T, b.reshape(1, fan_out)))
    return params


def fold_params(params):
    """Fold the 5 affine layers into one (W_eff, b_eff).
    Only the OUTPUT dim is padded (2 -> 128) for a lane-dense store; the K dim
    stays at the true 1434 so x needs no host-side padding at all."""
    w_eff, b_eff = params[0]
    for w, b in params[1:]:
        w_eff = w_eff @ w          # (IN_DIM, out_next)
        b_eff = b_eff @ w + b      # (1, out_next)
    w_pad = jnp.zeros((IN_DIM, OUT_PAD), jnp.float32).at[:, :OUT_DIM].set(w_eff)
    b_pad = jnp.zeros((1, OUT_PAD), jnp.float32).at[:, :OUT_DIM].set(b_eff)
    return w_pad, b_pad


@jax.jit
def net_forward(x, w_pad, b_pad):
    """x: (B, 1434) float32.  Returns (B, 2) float32."""
    B = x.shape[0]
    tile_b = min(MAX_TILE_B, _round_up(B, SUBLANE))
    grid = (pl.cdiv(B, tile_b),)   # ragged last tile handled by edge-block masking

    cost = pl.CostEstimate(
        flops=2 * B * IN_DIM * OUT_PAD,
        transcendentals=0,
        bytes_accessed=4 * (B * IN_DIM + B * OUT_PAD + IN_DIM * OUT_PAD + OUT_PAD),
    )

    out_slab = pl.pallas_call(
        affine_kernel,
        out_shape=jax.ShapeDtypeStruct((B, OUT_PAD), jnp.float32),
        grid=grid,
        in_specs=[
            # x: streamed / double-buffered per batch tile; last dim == full
            # array dim (1434), so no host pad and no OOB reads.
            pl.BlockSpec((tile_b, IN_DIM), lambda i: (i, 0)),
            # folded weights + bias: constant block index -> fetched once,
            # VMEM-resident across all grid steps.
            pl.BlockSpec((IN_DIM, OUT_PAD), lambda i: (0, 0)),
            pl.BlockSpec((1, OUT_PAD), lambda i: (0, 0)),
        ],
        out_specs=pl.BlockSpec((tile_b, OUT_PAD), lambda i: (i, 0)),
        compiler_params=pltpu.CompilerParams(
            dimension_semantics=("parallel",),
            vmem_limit_bytes=VMEM_LIMIT_BYTES,
        ),
        cost_estimate=cost,
    )(x, w_pad, b_pad)

    # Column slice fuses under jit (no separate HBM round trip for rows:
    # the output array is exactly B rows thanks to the ragged grid).
    return out_slab[:, :OUT_DIM]


def net_forward_ref(x, params):
    """Un-folded pure-JAX reference matching the PyTorch forward layer by layer."""
    h = x
    for w, b in params:
        h = h @ w + b
    return h


if __name__ == "__main__":
    key = jax.random.PRNGKey(0)
    kx, kp = jax.random.split(key)
    B = 8
    x = jax.random.normal(kx, (B, IN_DIM), jnp.float32)
    params = init_params(kp)

    w_pad, b_pad = fold_params(params)

    out = net_forward(x, w_pad, b_pad)
    out = jax.block_until_ready(out)

    ref = net_forward_ref(x, params)
    assert out.shape == (B, OUT_DIM)
    assert jnp.allclose(out, ref, atol=1e-4, rtol=1e-4), "mismatch vs reference"
    print("KERNEL_OK")
</pallas_src>

<mosaic_0001>
module attributes {stable_mosaic.version = 11 : i64} {
  func.func @affine_kernel(%arg0: i32, %arg1: memref<8x1434xf32, #tpu.memory_space<vmem>>, %arg2: memref<1434x128xf32, #tpu.memory_space<vmem>>, %arg3: memref<1x128xf32, #tpu.memory_space<vmem>>, %arg4: memref<8x128xf32, #tpu.memory_space<vmem>>) attributes {dimension_semantics = [#tpu.dimension_semantics<parallel>], iteration_bounds = array<i64: 1>, scalar_prefetch = 0 : i64, scratch_operands = 0 : i64, tpu.core_type = #tpu.core_type<tc>, window_params = [{transform_indices = @transform_0, window_bounds = array<i64: 8, 1434>}, {pipeline_mode = #tpu.pipeline_mode<synchronous>, transform_indices = @transform_1, window_bounds = array<i64: 1434, 128>}, {pipeline_mode = #tpu.pipeline_mode<synchronous>, transform_indices = @transform_2, window_bounds = array<i64: 1, 128>}, {transform_indices = @transform_3, window_bounds = array<i64: 8, 128>}]} {
    %c0 = arith.constant 0 : index
    %c0_0 = arith.constant 0 : index
    %0 = vector.load %arg1[%c0, %c0_0] : memref<8x1434xf32, #tpu.memory_space<vmem>>, vector<8x1434xf32>
    %c0_1 = arith.constant 0 : index
    %c0_2 = arith.constant 0 : index
    %1 = vector.load %arg2[%c0_1, %c0_2] : memref<1434x128xf32, #tpu.memory_space<vmem>>, vector<1434x128xf32>
    %cst = arith.constant dense<0.000000e+00> : vector<8x128xf32>
    %2 = tpu.matmul %0, %1, %cst {dimension_numbers = #tpu.dot_dimension_numbers<[1], [0], [0], [1], [0, 0, 1, 1], [], []>} : vector<8x1434xf32>, vector<1434x128xf32>, vector<8x128xf32> -> vector<8x128xf32>
    %c0_3 = arith.constant 0 : index
    %c0_4 = arith.constant 0 : index
    %3 = vector.load %arg3[%c0_3, %c0_4] : memref<1x128xf32, #tpu.memory_space<vmem>>, vector<1x128xf32>
    %4 = vector.broadcast %3 : vector<1x128xf32> to vector<8x128xf32>
    %5 = arith.addf %2, %4 : vector<8x128xf32>
    %c0_5 = arith.constant 0 : index
    %c0_6 = arith.constant 0 : index
    %6 = vector.load %arg4[%c0_5, %c0_6] : memref<8x128xf32, #tpu.memory_space<vmem>>, vector<8x128xf32>
    tpu.vector_store %arg4[%c0_5, %c0_6], %5 {strides = array<i32>} : memref<8x128xf32, #tpu.memory_space<vmem>>, vector<8x128xf32>,
    return
  }
  func.func @transform_0(%arg0: i32) -> (i32, i32) {
    %c0_i32 = arith.constant 0 : i32
    %c0_i32_0 = arith.constant 0 : i32
    return %arg0, %c0_i32 : i32, i32
  }
  func.func @transform_1(%arg0: i32) -> (i32, i32) {
    %c0_i32 = arith.constant 0 : i32
    %c0_i32_0 = arith.constant 0 : i32
    %c0_i32_1 = arith.constant 0 : i32
    return %c0_i32, %c0_i32_0 : i32, i32
  }
  func.func @transform_2(%arg0: i32) -> (i32, i32) {
    %c0_i32 = arith.constant 0 : i32
    %c0_i32_0 = arith.constant 0 : i32
    %c0_i32_1 = arith.constant 0 : i32
    return %c0_i32, %c0_i32_0 : i32, i32
  }
  func.func @transform_3(%arg0: i32) -> (i32, i32) {
    %c0_i32 = arith.constant 0 : i32
    %c0_i32_0 = arith.constant 0 : i32
    return %arg0, %c0_i32 : i32, i32
  }
}

</mosaic_0001>

<llo_original>
// kernel: net_forward.1
$region0: #{net_forward.1}
  #allocation0 [shape = 'u32[]', space=smem, size = 0x4, offset = 0x4, fixed_abs, tag = 'smem constant byte address 0x4 - core index']
  #allocation1 [shape = 'u32[72,128]{1,0:T(1,128)}', space=vmem, size = 0x9000, scoped, tag = 'internal scratch']
  %s0 = inlined_call_operand.hbm [shape: f32[8,1434], index: 0, kind: input, shape index: {}]
  %s1 = inlined_call_operand.hbm [shape: f32[1434,128], index: 1, kind: input, shape index: {}]
  %s2 = inlined_call_operand.vmem [shape: f32[1,128], index: 2, kind: input, shape index: {}]
  %s3 = inlined_call_operand.vmem [shape: f32[8,128], index: 3, kind: output, shape index: {}]
  %s4 = sld [smem:[#allocation0]]
  $region30: #{net_forward.1} parent=0
    _
  %s6 = ssub.s32 1, %s4
  %s7 = scalar_select 0, %s6, %s4
  $region1: #{net_forward.1} parent=0
    #allocation2 [shape = 'u8[49152]{0}', space=vmem, size = 0xc000, scoped, tag = 'input window, operand 0, single buffered']
    #allocation3 [shape = 's32[1]{0}', space=sflag, size = 0x4, scoped, tag = 'scoped memory for net_forward.1']
    #allocation4 [shape = 'u8[737280]{0}', space=vmem, size = 0xb4000, scoped, tag = 'input window, operand 1, single buffered']
    #allocation5 [shape = 's32[1]{0}', space=sflag, size = 0x4, scoped, tag = 'scoped memory for net_forward.1']
    %8 = vsyncpa [#allocation3], 0
    %9 = vsyncpa [#allocation5], 0
    // Predicated region
    $region2: #{net_forward.1} parent=1 // pred_check
      _
    $region3: #{net_forward.1} parent=1 // pred_check_branch
      %11 = sbr.rel (0) target = $region5
    $region4: #{net_forward.1} parent=1 // pred_region
      %13 = vsyncadd [#allocation3], 0
      %s15 = sshll.u32 %s0, 4
      %s16 = int_to_ptr.hbm [resolvable:$true] %s15
      %s17 = sshll.u32 [#allocation2], 4
      %s18 = int_to_ptr.vmem [resolvable:$true] %s17
      %20 = dma.hbm_to_vmem [thread:$0]  %s16, 1536, %s18, [#allocation3]
    $region5: #{net_forward.1} parent=1 // pred_fallthru
      _
    // Predicated region
    $region6: #{net_forward.1} parent=1 // pred_check
      _
    $region7: #{net_forward.1} parent=1 // pred_check_branch
      %22 = sbr.rel (0) target = $region9
    $region8: #{net_forward.1} parent=1 // pred_region
      %24 = vsyncadd [#allocation5], 0
      %s25 = sshll.u32 %s1, 4
      %s26 = int_to_ptr.hbm [resolvable:$true] %s25
      %s27 = sshll.u32 [#allocation4], 4
      %s28 = int_to_ptr.vmem [resolvable:$true] %s27
      %33 = dma.hbm_to_vmem [thread:$0]  %s26, 23040, %s28, [#allocation5], 128, 128, 8
    $region9: #{net_forward.1} parent=1 // pred_fallthru
      _
    // Predicated region
    $region10: #{net_forward.1} parent=1 // pred_check
      _
    $region11: #{net_forward.1} parent=1 // pred_check_branch
      %35 = sbr.rel (0) target = $region13
    $region12: #{net_forward.1} parent=1 // pred_region
      _
    $region13: #{net_forward.1} parent=1 // pred_fallthru
      _
    // Predicated region
    $region14: #{net_forward.1} parent=1 // pred_check
      _
    $region15: #{net_forward.1} parent=1 // pred_check_branch
      %37 = sbr.rel (0) target = $region17
    $region16: #{net_forward.1} parent=1 // pred_region
      %39 = dma.done [#allocation3], 1536
    $region17: #{net_forward.1} parent=1 // pred_fallthru
      _
    // Predicated region
    $region18: #{net_forward.1} parent=1 // pred_check
      _
    $region19: #{net_forward.1} parent=1 // pred_check_branch
      %41 = sbr.rel (0) target = $region21
    $region20: #{net_forward.1} parent=1 // pred_region
      %43 = dma.done [#allocation5], 23040
    $region21: #{net_forward.1} parent=1 // pred_fallthru
      _
    %v44 = vld [vmem:[#allocation2] sm:$0xff]
    %v45 = vld [vmem:[#allocation2 + $0x8] sm:$0xff]
    %v46 = vld [vmem:[#allocation2 + $0x10] sm:$0xff]
    %v47 = vld [vmem:[#allocation2 + $0x18] sm:$0xff]
    %v48 = vld [vmem:[#allocation2 + $0x20] sm:$0xff]
    %v49 = vld [vmem:[#allocation2 + $0x28] sm:$0xff]
    %v50 = vld [vmem:[#allocation2 + $0x30] sm:$0xff]
    %v51 = vld [vmem:[#allocation2 + $0x38] sm:$0xff]
    %v52 = vld [vmem:[#allocation2 + $0x40] sm:$0xff]
    %v53 = vld [vmem:[#allocation2 + $0x48] sm:$0xff]
    %v54 = vld [vmem:[#allocation2 + $0x50] sm:$0xff]
    %v55 = vld [vmem:[#allocation2 + $0x58] sm:$0xff]
    %v56 = vld [vmem:[#allocation4] sm:$0xff]
    %v57 = vld [vmem:[#allocation4 + $0x8] sm:$0xff]
    %v58 = vld [vmem:[#allocation4 + $0x10] sm:$0xff]
    %v59 = vld [vmem:[#allocation4 + $0x18] sm:$0xff]
    %v60 = vld [vmem:[#allocation4 + $0x20] sm:$0xff]
    %v61 = vld [vmem:[#allocation4 + $0x28] sm:$0xff]
    %v62 = vld [vmem:[#allocation4 + $0x30] sm:$0xff]
    %v63 = vld [vmem:[#allocation4 + $0x38] sm:$0xff]
    %v64 = vld [vmem:[#allocation4 + $0x40] sm:$0xff]
    %v65 = vld [vmem:[#allocation4 + $0x48] sm:$0xff]
    %v66 = vld [vmem:[#allocation4 + $0x50] sm:$0xff]
    %v67 = vld [vmem:[#allocation4 + $0x58] sm:$0xff]
    %v68 = vld [vmem:[#allocation4 + $0x60] sm:$0xff]
    %v69 = vld [vmem:[#allocation4 + $0x68] sm:$0xff]
    %v70 = vld [vmem:[#allocation4 + $0x70] sm:$0xff]
    %v71 = vld [vmem:[#allocation4 + $0x78] sm:$0xff]
    %v72 = vld [vmem:[#allocation4 + $0x80] sm:$0xff]
    %v73 = vld [vmem:[#allocation4 + $0x88] sm:$0xff]
    %v74 = vld [vmem:[#allocation4 + $0x90] sm:$0xff]
    %v75 = vld [vmem:[#allocation4 + $0x98] sm:$0xff]
    %v76 = vld [vmem:[#allocation4 + $0xa0] sm:$0xff]
    %v77 = vld [vmem:[#allocation4 + $0xa8] sm:$0xff]
    %v78 = vld [vmem:[#allocation4 + $0xb0] sm:$0xff]
    %v79 = vld [vmem:[#allocation4 + $0xb8] sm:$0xff]
    %v80 = vld [vmem:[#allocation4 + $0xc0] sm:$0xff]
    %v81 = vld [vmem:[#allocation4 + $0xc8] sm:$0xff]
    %v82 = vld [vmem:[#allocation4 + $0xd0] sm:$0xff]
    %v83 = vld [vmem:[#allocation4 + $0xd8] sm:$0xff]
    %v84 = vld [vmem:[#allocation4 + $0xe0] sm:$0xff]
    %v85 = vld [vmem:[#allocation4 + $0xe8] sm:$0xff]
    %v86 = vld [vmem:[#allocation4 + $0xf0] sm:$0xff]
    %v87 = vld [vmem:[#allocation4 + $0xf8] sm:$0xff]
    %v88 = vld [vmem:[#allocation4 + $0x100] sm:$0xff]
    %v89 = vld [vmem:[#allocation4 + $0x108] sm:$0xff]
    %v90 = vld [vmem:[#allocation4 + $0x110] sm:$0xff]
    %v91 = vld [vmem:[#allocation4 + $0x118] sm:$0xff]
    %v92 = vld [vmem:[#allocation4 + $0x120] sm:$0xff]
    %v93 = vld [vmem:[#allocation4 + $0x128] sm:$0xff]
    %v94 = vld [vmem:[#allocation4 + $0x130] sm:$0xff]
    %v95 = vld [vmem:[#allocation4 + $0x138] sm:$0xff]
    %v96 = vld [vmem:[#allocation4 + $0x140] sm:$0xff]
    %v97 = vld [vmem:[#allocation4 + $0x148] sm:$0xff]
    %v98 = vld [vmem:[#allocation4 + $0x150] sm:$0xff]
    %v99 = vld [vmem:[#allocation4 + $0x158] sm:$0xff]
    %v100 = vld [vmem:[#allocation4 + $0x160] sm:$0xff]
    %v101 = vld [vmem:[#allocation4 + $0x168] sm:$0xff]
    %v102 = vld [vmem:[#allocation4 + $0x170] sm:$0xff]
    %v103 = vld [vmem:[#allocation4 + $0x178] sm:$0xff]
    %v104 = vld [vmem:[#allocation4 + $0x180] sm:$0xff]
    %v105 = vld [vmem:[#allocation4 + $0x188] sm:$0xff]
    %v106 = vld [vmem:[#allocation4 + $0x190] sm:$0xff]
    %v107 = vld [vmem:[#allocation4 + $0x198] sm:$0xff]
    %v108 = vld [vmem:[#allocation4 + $0x1a0] sm:$0xff]
    %v109 = vld [vmem:[#allocation4 + $0x1a8] sm:$0xff]
    %v110 = vld [vmem:[#allocation4 + $0x1b0] sm:$0xff]
    %v111 = vld [vmem:[#allocation4 + $0x1b8] sm:$0xff]
    %v112 = vld [vmem:[#allocation4 + $0x1c0] sm:$0xff]
    %v113 = vld [vmem:[#allocation4 + $0x1c8] sm:$0xff]
    %v114 = vld [vmem:[#allocation4 + $0x1d0] sm:$0xff]
    %v115 = vld [vmem:[#allocation4 + $0x1d8] sm:$0xff]
    %v116 = vld [vmem:[#allocation4 + $0x1e0] sm:$0xff]
    %v117 = vld [vmem:[#allocation4 + $0x1e8] sm:$0xff]
    %v118 = vld [vmem:[#allocation4 + $0x1f0] sm:$0xff]
    %v119 = vld [vmem:[#allocation4 + $0x1f8] sm:$0xff]
    %v120 = vld [vmem:[#allocation4 + $0x200] sm:$0xff]
    %v121 = vld [vmem:[#allocation4 + $0x208] sm:$0xff]
    %v122 = vld [vmem:[#allocation4 + $0x210] sm:$0xff]
    %v123 = vld [vmem:[#allocation4 + $0x218] sm:$0xff]
    %v124 = vld [vmem:[#allocation4 + $0x220] sm:$0xff]
    %v125 = vld [vmem:[#allocation4 + $0x228] sm:$0xff]
    %v126 = vld [vmem:[#allocation4 + $0x230] sm:$0xff]
    %v127 = vld [vmem:[#allocation4 + $0x238] sm:$0xff]
    %v128 = vld [vmem:[#allocation4 + $0x240] sm:$0xff]
    %v129 = vld [vmem:[#allocation4 + $0x248] sm:$0xff]
    %v130 = vld [vmem:[#allocation4 + $0x250] sm:$0xff]
    %v131 = vld [vmem:[#allocation4 + $0x258] sm:$0xff]
    %v132 = vld [vmem:[#allocation4 + $0x260] sm:$0xff]
    %v133 = vld [vmem:[#allocation4 + $0x268] sm:$0xff]
    %v134 = vld [vmem:[#allocation4 + $0x270] sm:$0xff]
    %v135 = vld [vmem:[#allocation4 + $0x278] sm:$0xff]
    %v136 = vld [vmem:[#allocation4 + $0x280] sm:$0xff]
    %v137 = vld [vmem:[#allocation4 + $0x288] sm:$0xff]
    %v138 = vld [vmem:[#allocation4 + $0x290] sm:$0xff]
    %v139 = vld [vmem:[#allocation4 + $0x298] sm:$0xff]
    %v140 = vld [vmem:[#allocation4 + $0x2a0] sm:$0xff]
    %v141 = vld [vmem:[#allocation4 + $0x2a8] sm:$0xff]
    %v142 = vld [vmem:[#allocation4 + $0x2b0] sm:$0xff]
    %v143 = vld [vmem:[#allocation4 + $0x2b8] sm:$0xff]
    %v144 = vld [vmem:[#allocation4 + $0x2c0] sm:$0xff]
    %v145 = vld [vmem:[#allocation4 + $0x2c8] sm:$0xff]
    %v146 = vld [vmem:[#allocation4 + $0x2d0] sm:$0xff]
    %v147 = vld [vmem:[#allocation4 + $0x2d8] sm:$0xff]
    %v148 = vld [vmem:[#allocation4 + $0x2e0] sm:$0xff]
    %v149 = vld [vmem:[#allocation4 + $0x2e8] sm:$0xff]
    %v150 = vld [vmem:[#allocation4 + $0x2f0] sm:$0xff]
    %v151 = vld [vmem:[#allocation4 + $0x2f8] sm:$0xff]
    %v152 = vld [vmem:[#allocation4 + $0x300] sm:$0xff]
    %v153 = vld [vmem:[#allocation4 + $0x308] sm:$0xff]
    %v154 = vld [vmem:[#allocation4 + $0x310] sm:$0xff]
    %v155 = vld [vmem:[#allocation4 + $0x318] sm:$0xff]
    %v156 = vld [vmem:[#allocation4 + $0x320] sm:$0xff]
    %v157 = vld [vmem:[#allocation4 + $0x328] sm:$0xff]
    %v158 = vld [vmem:[#allocation4 + $0x330] sm:$0xff]
    %v159 = vld [vmem:[#allocation4 + $0x338] sm:$0xff]
    %v160 = vld [vmem:[#allocation4 + $0x340] sm:$0xff]
    %v161 = vld [vmem:[#allocation4 + $0x348] sm:$0xff]
    %v162 = vld [vmem:[#allocation4 + $0x350] sm:$0xff]
    %v163 = vld [vmem:[#allocation4 + $0x358] sm:$0xff]
    %v164 = vld [vmem:[#allocation4 + $0x360] sm:$0xff]
    %v165 = vld [vmem:[#allocation4 + $0x368] sm:$0xff]
    %v166 = vld [vmem:[#allocation4 + $0x370] sm:$0xff]
    %v167 = vld [vmem:[#allocation4 + $0x378] sm:$0xff]
    %v168 = vld [vmem:[#allocation4 + $0x380] sm:$0xff]
    %v169 = vld [vmem:[#allocation4 + $0x388] sm:$0xff]
    %v170 = vld [vmem:[#allocation4 + $0x390] sm:$0xff]
    %v171 = vld [vmem:[#allocation4 + $0x398] sm:$0xff]
    %v172 = vld [vmem:[#allocation4 + $0x3a0] sm:$0xff]
    %v173 = vld [vmem:[#allocation4 + $0x3a8] sm:$0xff]
    %v174 = vld [vmem:[#allocation4 + $0x3b0] sm:$0xff]
    %v175 = vld [vmem:[#allocation4 + $0x3b8] sm:$0xff]
    %v176 = vld [vmem:[#allocation4 + $0x3c0] sm:$0xff]
    %v177 = vld [vmem:[#allocation4 + $0x3c8] sm:$0xff]
    %v178 = vld [vmem:[#allocation4 + $0x3d0] sm:$0xff]
    %v179 = vld [vmem:[#allocation4 + $0x3d8] sm:$0xff]
    %v180 = vld [vmem:[#allocation4 + $0x3e0] sm:$0xff]
    %v181 = vld [vmem:[#allocation4 + $0x3e8] sm:$0xff]
    %v182 = vld [vmem:[#allocation4 + $0x3f0] sm:$0xff]
    %v183 = vld [vmem:[#allocation4 + $0x3f8] sm:$0xff]
    %v184 = vld [vmem:[#allocation4 + $0x400] sm:$0xff]
    %v185 = vld [vmem:[#allocation4 + $0x408] sm:$0xff]
    %v186 = vld [vmem:[#allocation4 + $0x410] sm:$0xff]
    %v187 = vld [vmem:[#allocation4 + $0x418] sm:$0xff]
    %v188 = vld [vmem:[#allocation4 + $0x420] sm:$0xff]
    %v189 = vld [vmem:[#allocation4 + $0x428] sm:$0xff]
    %v190 = vld [vmem:[#allocation4 + $0x430] sm:$0xff]
    %v191 = vld [vmem:[#allocation4 + $0x438] sm:$0xff]
    %v192 = vld [vmem:[#allocation4 + $0x440] sm:$0xff]
    %v193 = vld [vmem:[#allocation4 + $0x448] sm:$0xff]
    %v194 = vld [vmem:[#allocation4 + $0x450] sm:$0xff]
    %v195 = vld [vmem:[#allocation4 + $0x458] sm:$0xff]
    %v196 = vld [vmem:[#allocation4 + $0x460] sm:$0xff]
    %v197 = vld [vmem:[#allocation4 + $0x468] sm:$0xff]
    %v198 = vld [vmem:[#allocation4 + $0x470] sm:$0xff]
    %v199 = vld [vmem:[#allocation4 + $0x478] sm:$0xff]
    %v200 = vld [vmem:[#allocation4 + $0x480] sm:$0xff]
    %v201 = vld [vmem:[#allocation4 + $0x488] sm:$0xff]
    %v202 = vld [vmem:[#allocation4 + $0x490] sm:$0xff]
    %v203 = vld [vmem:[#allocation4 + $0x498] sm:$0xff]
    %v204 = vld [vmem:[#allocation4 + $0x4a0] sm:$0xff]
    %v205 = vld [vmem:[#allocation4 + $0x4a8] sm:$0xff]
    %v206 = vld [vmem:[#allocation4 + $0x4b0] sm:$0xff]
    %v207 = vld [vmem:[#allocation4 + $0x4b8] sm:$0xff]
    %v208 = vld [vmem:[#allocation4 + $0x4c0] sm:$0xff]
    %v209 = vld [vmem:[#allocation4 + $0x4c8] sm:$0xff]
    %v210 = vld [vmem:[#allocation4 + $0x4d0] sm:$0xff]
    %v211 = vld [vmem:[#allocation4 + $0x4d8] sm:$0xff]
    %v212 = vld [vmem:[#allocation4 + $0x4e0] sm:$0xff]
    %v213 = vld [vmem:[#allocation4 + $0x4e8] sm:$0xff]
    %v214 = vld [vmem:[#allocation4 + $0x4f0] sm:$0xff]
    %v215 = vld [vmem:[#allocation4 + $0x4f8] sm:$0xff]
    %v216 = vld [vmem:[#allocation4 + $0x500] sm:$0xff]
    %v217 = vld [vmem:[#allocation4 + $0x508] sm:$0xff]
    %v218 = vld [vmem:[#allocation4 + $0x510] sm:$0xff]
    %v219 = vld [vmem:[#allocation4 + $0x518] sm:$0xff]
    %v220 = vld [vmem:[#allocation4 + $0x520] sm:$0xff]
    %v221 = vld [vmem:[#allocation4 + $0x528] sm:$0xff]
    %v222 = vld [vmem:[#allocation4 + $0x530] sm:$0xff]
    %v223 = vld [vmem:[#allocation4 + $0x538] sm:$0xff]
    %v224 = vld [vmem:[#allocation4 + $0x540] sm:$0xff]
    %v225 = vld [vmem:[#allocation4 + $0x548] sm:$0xff]
    %v226 = vld [vmem:[#allocation4 + $0x550] sm:$0xff]
    %v227 = vld [vmem:[#allocation4 + $0x558] sm:$0xff]
    %v228 = vld [vmem:[#allocation4 + $0x560] sm:$0xff]
    %v229 = vld [vmem:[#allocation4 + $0x568] sm:$0xff]
    %v230 = vld [vmem:[#allocation4 + $0x570] sm:$0xff]
    %v231 = vld [vmem:[#allocation4 + $0x578] sm:$0xff]
    %v232 = vld [vmem:[#allocation4 + $0x580] sm:$0xff]
    %v233 = vld [vmem:[#allocation4 + $0x588] sm:$0xff]
    %v234 = vld [vmem:[#allocation4 + $0x590] sm:$0xff]
    %v235 = vld [vmem:[#allocation4 + $0x598] sm:$0x3]
    %v236 = vld [vmem:[%s2] sm:$0x1]
    %v238 = vperm.slane %v236, 0
    %vm240 = vcmask 211968
    %v242 = vsel %vm240, %v55, 0
    %vm244 = vcmask 1041408
    %v246 = vsel %vm244, %v235, 0
    %248 = vmatpush.msra.mxu0 %v71
    %249 = vmatpush.msra.mxu0 %v70
    %250 = vmatpush.msra.mxu0 %v69
    %251 = vmatpush.msra.mxu0 %v68
    %252 = vmatpush.msra.mxu0 %v67
    %253 = vmatpush.msra.mxu0 %v66
    %254 = vmatpush.msra.mxu0 %v65
    %255 = vmatpush.msra.mxu0 %v64
    %256 = vmatpush.msra.mxu0 %v63
    %257 = vmatpush.msra.mxu0 %v62
    %258 = vmatpush.msra.mxu0 %v61
    %259 = vmatpush.msra.mxu0 %v60
    %260 = vmatpush.msra.mxu0 %v59
    %261 = vmatpush.msra.mxu0 %v58
    %262 = vmatpush.msra.mxu0 %v57
    %263 = vmatpush.msra.mxu0 %v56
    %264 = vmatmul.f32.gmra.mxu0 %v44
    %v265 = vpop.f32.mrf.mxu0
    %v266 = vadd.f32 %v238, %v265
    %267 = vdwg.mxu0
    %268 = vmatpush.msra.mxu0 %v87
    %269 = vmatpush.msra.mxu0 %v86
    %270 = vmatpush.msra.mxu0 %v85
    %271 = vmatpush.msra.mxu0 %v84
    %272 = vmatpush.msra.mxu0 %v83
    %273 = vmatpush.msra.mxu0 %v82
    %274 = vmatpush.msra.mxu0 %v81
    %275 = vmatpush.msra.mxu0 %v80
    %276 = vmatpush.msra.mxu0 %v79
    %277 = vmatpush.msra.mxu0 %v78
    %278 = vmatpush.msra.mxu0 %v77
    %279 = vmatpush.msra.mxu0 %v76
    %280 = vmatpush.msra.mxu0 %v75
    %281 = vmatpush.msra.mxu0 %v74
    %282 = vmatpush.msra.mxu0 %v73
    %283 = vmatpush.msra.mxu0 %v72
    %284 = vmatmul.f32.gmra.mxu0 %v45
    %v285 = vpop.f32.mrf.mxu0
    %v286 = vadd.f32 %v266, %v285
    %287 = vdwg.mxu0
    %288 = vmatpush.msra.mxu0 %v103
    %289 = vmatpush.msra.mxu0 %v102
    %290 = vmatpush.msra.mxu0 %v101
    %291 = vmatpush.msra.mxu0 %v100
    %292 = vmatpush.msra.mxu0 %v99
    %293 = vmatpush.msra.mxu0 %v98
    %294 = vmatpush.msra.mxu0 %v97
    %295 = vmatpush.msra.mxu0 %v96
    %296 = vmatpush.msra.mxu0 %v95
    %297 = vmatpush.msra.mxu0 %v94
    %298 = vmatpush.msra.mxu0 %v93
    %299 = vmatpush.msra.mxu0 %v92
    %300 = vmatpush.msra.mxu0 %v91
    %301 = vmatpush.msra.mxu0 %v90
    %302 = vmatpush.msra.mxu0 %v89
    %303 = vmatpush.msra.mxu0 %v88
    %304 = vmatmul.f32.gmra.mxu0 %v46
    %v305 = vpop.f32.mrf.mxu0
    %v306 = vadd.f32 %v286, %v305
    %307 = vdwg.mxu0
    %308 = vmatpush.msra.mxu0 %v119
    %309 = vmatpush.msra.mxu0 %v118
    %310 = vmatpush.msra.mxu0 %v117
    %311 = vmatpush.msra.mxu0 %v116
    %312 = vmatpush.msra.mxu0 %v115
    %313 = vmatpush.msra.mxu0 %v114
    %314 = vmatpush.msra.mxu0 %v113
    %315 = vmatpush.msra.mxu0 %v112
    %316 = vmatpush.msra.mxu0 %v111
    %317 = vmatpush.msra.mxu0 %v110
    %318 = vmatpush.msra.mxu0 %v109
    %319 = vmatpush.msra.mxu0 %v108
    %320 = vmatpush.msra.mxu0 %v107
    %321 = vmatpush.msra.mxu0 %v106
    %322 = vmatpush.msra.mxu0 %v105
    %323 = vmatpush.msra.mxu0 %v104
    %324 = vmatmul.f32.gmra.mxu0 %v47
    %v325 = vpop.f32.mrf.mxu0
    %v326 = vadd.f32 %v306, %v325
    %327 = vdwg.mxu0
    %328 = vmatpush.msra.mxu0 %v135
    %329 = vmatpush.msra.mxu0 %v134
    %330 = vmatpush.msra.mxu0 %v133
    %331 = vmatpush.msra.mxu0 %v132
    %332 = vmatpush.msra.mxu0 %v131
    %333 = vmatpush.msra.mxu0 %v130
    %334 = vmatpush.msra.mxu0 %v129
    %335 = vmatpush.msra.mxu0 %v128
    %336 = vmatpush.msra.mxu0 %v127
    %337 = vmatpush.msra.mxu0 %v126
    %338 = vmatpush.msra.mxu0 %v125
    %339 = vmatpush.msra.mxu0 %v124
    %340 = vmatpush.msra.mxu0 %v123
    %341 = vmatpush.msra.mxu0 %v122
    %342 = vmatpush.msra.mxu0 %v121
    %343 = vmatpush.msra.mxu0 %v120
    %344 = vmatmul.f32.gmra.mxu0 %v48
    %v345 = vpop.f32.mrf.mxu0
    %v346 = vadd.f32 %v326, %v345
    %347 = vdwg.mxu0
    %348 = vmatpush.msra.mxu0 %v151
    %349 = vmatpush.msra.mxu0 %v150
    %350 = vmatpush.msra.mxu0 %v149
    %351 = vmatpush.msra.mxu0 %v148
    %352 = vmatpush.msra.mxu0 %v147
    %353 = vmatpush.msra.mxu0 %v146
    %354 = vmatpush.msra.mxu0 %v145
    %355 = vmatpush.msra.mxu0 %v144
    %356 = vmatpush.msra.mxu0 %v143
    %357 = vmatpush.msra.mxu0 %v142
    %358 = vmatpush.msra.mxu0 %v141
    %359 = vmatpush.msra.mxu0 %v140
    %360 = vmatpush.msra.mxu0 %v139
    %361 = vmatpush.msra.mxu0 %v138
    %362 = vmatpush.msra.mxu0 %v137
    %363 = vmatpush.msra.mxu0 %v136
    %364 = vmatmul.f32.gmra.mxu0 %v49
    %v365 = vpop.f32.mrf.mxu0
    %v366 = vadd.f32 %v346, %v365
    %367 = vdwg.mxu0
    %368 = vmatpush.msra.mxu0 %v167
    %369 = vmatpush.msra.mxu0 %v166
    %370 = vmatpush.msra.mxu0 %v165
    %371 = vmatpush.msra.mxu0 %v164
    %372 = vmatpush.msra.mxu0 %v163
    %373 = vmatpush.msra.mxu0 %v162
    %374 = vmatpush.msra.mxu0 %v161
    %375 = vmatpush.msra.mxu0 %v160
    %376 = vmatpush.msra.mxu0 %v159
    %377 = vmatpush.msra.mxu0 %v158
    %378 = vmatpush.msra.mxu0 %v157
    %379 = vmatpush.msra.mxu0 %v156
    %380 = vmatpush.msra.mxu0 %v155
    %381 = vmatpush.msra.mxu0 %v154
    %382 = vmatpush.msra.mxu0 %v153
    %383 = vmatpush.msra.mxu0 %v152
    %384 = vmatmul.f32.gmra.mxu0 %v50
    %v385 = vpop.f32.mrf.mxu0
    %v386 = vadd.f32 %v366, %v385
    %387 = vdwg.mxu0
    %388 = vmatpush.msra.mxu0 %v183
    %389 = vmatpush.msra.mxu0 %v182
    %390 = vmatpush.msra.mxu0 %v181
    %391 = vmatpush.msra.mxu0 %v180
    %392 = vmatpush.msra.mxu0 %v179
    %393 = vmatpush.msra.mxu0 %v178
    %394 = vmatpush.msra.mxu0 %v177
    %395 = vmatpush.msra.mxu0 %v176
    %396 = vmatpush.msra.mxu0 %v175
    %397 = vmatpush.msra.mxu0 %v174
    %398 = vmatpush.msra.mxu0 %v173
    %399 = vmatpush.msra.mxu0 %v172
    %400 = vmatpush.msra.mxu0 %v171
    %401 = vmatpush.msra.mxu0 %v170
    %402 = vmatpush.msra.mxu0 %v169
    %403 = vmatpush.msra.mxu0 %v168
    %404 = vmatmul.f32.gmra.mxu0 %v51
    %v405 = vpop.f32.mrf.mxu0
    %v406 = vadd.f32 %v386, %v405
    %407 = vdwg.mxu0
    %408 = vmatpush.msra.mxu0 %v199
    %409 = vmatpush.msra.mxu0 %v198
    %410 = vmatpush.msra.mxu0 %v197
    %411 = vmatpush.msra.mxu0 %v196
    %412 = vmatpush.msra.mxu0 %v195
    %413 = vmatpush.msra.mxu0 %v194
    %414 = vmatpush.msra.mxu0 %v193
    %415 = vmatpush.msra.mxu0 %v192
    %416 = vmatpush.msra.mxu0 %v191
    %417 = vmatpush.msra.mxu0 %v190
    %418 = vmatpush.msra.mxu0 %v189
    %419 = vmatpush.msra.mxu0 %v188
    %420 = vmatpush.msra.mxu0 %v187
    %421 = vmatpush.msra.mxu0 %v186
    %422 = vmatpush.msra.mxu0 %v185
    %423 = vmatpush.msra.mxu0 %v184
    %424 = vmatmul.f32.gmra.mxu0 %v52
    %v425 = vpop.f32.mrf.mxu0
    %v426 = vadd.f32 %v406, %v425
    %427 = vdwg.mxu0
    %428 = vmatpush.msra.mxu0 %v215
    %429 = vmatpush.msra.mxu0 %v214
    %430 = vmatpush.msra.mxu0 %v213
    %431 = vmatpush.msra.mxu0 %v212
    %432 = vmatpush.msra.mxu0 %v211
    %433 = vmatpush.msra.mxu0 %v210
    %434 = vmatpush.msra.mxu0 %v209
    %435 = vmatpush.msra.mxu0 %v208
    %436 = vmatpush.msra.mxu0 %v207
    %437 = vmatpush.msra.mxu0 %v206
    %438 = vmatpush.msra.mxu0 %v205
    %439 = vmatpush.msra.mxu0 %v204
    %440 = vmatpush.msra.mxu0 %v203
    %441 = vmatpush.msra.mxu0 %v202
    %442 = vmatpush.msra.mxu0 %v201
    %443 = vmatpush.msra.mxu0 %v200
    %444 = vmatmul.f32.gmra.mxu0 %v53
    %v445 = vpop.f32.mrf.mxu0
    %v446 = vadd.f32 %v426, %v445
    %447 = vdwg.mxu0
    %448 = vmatpush.msra.mxu0 %v231
    %449 = vmatpush.msra.mxu0 %v230
    %450 = vmatpush.msra.mxu0 %v229
    %451 = vmatpush.msra.mxu0 %v228
    %452 = vmatpush.msra.mxu0 %v227
    %453 = vmatpush.msra.mxu0 %v226
    %454 = vmatpush.msra.mxu0 %v225
    %455 = vmatpush.msra.mxu0 %v224
    %456 = vmatpush.msra.mxu0 %v223
    %457 = vmatpush.msra.mxu0 %v222
    %458 = vmatpush.msra.mxu0 %v221
    %459 = vmatpush.msra.mxu0 %v220
    %460 = vmatpush.msra.mxu0 %v219
    %461 = vmatpush.msra.mxu0 %v218
    %462 = vmatpush.msra.mxu0 %v217
    %463 = vmatpush.msra.mxu0 %v216
    %464 = vmatmul.f32.gmra.mxu0 %v54
    %v465 = vpop.f32.mrf.mxu0
    %v466 = vadd.f32 %v446, %v465
    %467 = vdwg.mxu0
    %468 = vmatpush.msra.mxu0 0.0
    %469 = vmatpush.msra.mxu0 0.0
    %470 = vmatpush.msra.mxu0 0.0
    %471 = vmatpush.msra.mxu0 0.0
    %472 = vmatpush.msra.mxu0 0.0
    %473 = vmatpush.msra.mxu0 0.0
    %474 = vmatpush.msra.mxu0 0.0
    %475 = vmatpush.msra.mxu0 0.0
    %476 = vmatpush.msra.mxu0 0.0
    %477 = vmatpush.msra.mxu0 0.0
    %478 = vmatpush.msra.mxu0 0.0
    %479 = vmatpush.msra.mxu0 0.0
    %480 = vmatpush.msra.mxu0 %v246
    %481 = vmatpush.msra.mxu0 %v234
    %482 = vmatpush.msra.mxu0 %v233
    %483 = vmatpush.msra.mxu0 %v232
    %484 = vmatmul.f32.gmra.mxu0 %v242
    %v485 = vpop.f32.mrf.mxu0
    %v486 = vadd.f32 %v466, %v485
    %487 = vdwg.mxu0
    %488 = vst [vmem:[%s3] sm:$0xff] %v486
    // Predicated region
    $region22: #{net_forward.1} parent=1 // pred_check
      _
    $region23: #{net_forward.1} parent=1 // pred_check_branch
      %490 = sbr.rel (0) target = $region25
    $region24: #{net_forward.1} parent=1 // pred_region
      _
    $region25: #{net_forward.1} parent=1 // pred_fallthru
      _
    // Predicated region
    $region26: #{net_forward.1} parent=1 // pred_check
      _
    $region27: #{net_forward.1} parent=1 // pred_check_branch
      %492 = sbr.rel (0) target = $region29
    $region28: #{net_forward.1} parent=1 // pred_region
      _
    $region29: #{net_forward.1} parent=1 // pred_fallthru
      _
    %493 = vsyncpa [#allocation3], 1
    %494 = vsyncpa [#allocation5], 1

</llo_original>
